<compile_context>
chip_gen: v6e
topology: v6e:2x2x1
jax: 0.10.0
libtpu: 0.0.40
codegen_flags: <defaults>
</compile_context>

<pallas_src>
import jax
import jax.numpy as jnp
from jax.experimental import pallas as pl
from jax.experimental.pallas import tpu as pltpu


def _round_up(v, m):
    return ((v + m - 1) // m) * m


def _vmem_capacity_bytes():
    try:
        return int(pltpu.get_tpu_info().vmem_capacity_bytes)
    except Exception:
        return 64 << 20  # conservative fallback (v7x per-core VMEM)


def _choose_batch_tile(B, budget_bytes, per_row_bytes):
    """Batch-block rows: multiple of 8 (or the full batch) so output blocks are legal."""
    tb = max(1, budget_bytes // max(1, per_row_bytes))
    tb = min(tb, 256)
    if tb >= B:
        if B > 16:
            # Keep >= 2 batch blocks so the "parallel" axis can shard across
            # TensorCores (v7x megacore); no-op on v5e/v6e.
            return _round_up(pl.cdiv(B, 2), 8)
        return B
    return max(8, (tb // 8) * 8)


def _make_router_kernel(L, tile_l, needs_mask, inv_l):
    n_chunks = tile_l // 8

    def kernel(x_ref, w1m_ref, w1a_ref, b1_ref, w2_ref, b2_ref, o_ref,
               sum_ref, max_ref):
        l_step = pl.program_id(1)
        n_l = pl.num_programs(1)

        @pl.when(l_step == 0)
        def _init():
            sum_ref[...] = jnp.zeros(sum_ref.shape, sum_ref.dtype)
            max_ref[...] = jnp.full(max_ref.shape, -jnp.inf, max_ref.dtype)

        def accumulate(masked):
            x_nat = x_ref[...]                               # (TB, tile_l, E)
            x_f32 = x_nat.astype(jnp.float32)
            if masked:
                rows = (jax.lax.broadcasted_iota(jnp.int32, (1, tile_l, 1), 1)
                        + l_step * tile_l)
                valid = rows < L
                x_f32 = jnp.where(valid, x_f32, 0.0)
                x_nat = jnp.where(valid, x_nat,
                                  jnp.array(-jnp.inf, dtype=x_nat.dtype))
            s = sum_ref[...]                                 # (TB, 8, E)
            m = max_ref[...]                                 # (TB, 8, E)
            # Static 8-row slices on vreg-tile boundaries: pure VPU adds/maxes,
            # no per-step cross-sublane XLU reduce.
            for c in range(n_chunks):
                sl = slice(c * 8, (c + 1) * 8)
                s = s + x_f32[:, sl, :]
                m = jnp.maximum(m, x_nat[:, sl, :].astype(m.dtype))
            sum_ref[...] = s
            max_ref[...] = m

        if needs_mask:
            @pl.when(l_step < n_l - 1)
            def _steady():
                accumulate(False)          # hot path: no mask work

            @pl.when(l_step == n_l - 1)
            def _last():
                accumulate(True)           # only the last tile is masked
        else:
            accumulate(False)

        @pl.when(l_step == n_l - 1)
        def _finalize():
            # Single 8->1 cross-sublane reduce, once per batch block.
            avg_out = jnp.sum(sum_ref[...], axis=1) * inv_l            # (TB, E)
            max_out = jnp.max(max_ref[...], axis=1).astype(jnp.float32)
            # cat([max, avg], -1) @ w1  ==  max @ w1[:E] + avg @ w1[E:]
            h = (jnp.dot(max_out, w1m_ref[...], preferred_element_type=jnp.float32)
                 + jnp.dot(avg_out, w1a_ref[...], preferred_element_type=jnp.float32)
                 + b1_ref[...])
            out = (jnp.dot(h, w2_ref[...], preferred_element_type=jnp.float32)
                   + b2_ref[...])
            out = jnp.maximum(jnp.tanh(out), 0.0)   # activateFunc: relu(tanh(x))
            o_ref[...] = out.astype(o_ref.dtype)

    return kernel


def router_forward(x, w1, b1, w2, b2, *, batch_tile=None, tile_l=None):
    B, L, E = x.shape
    assert w1.shape[0] == 2 * E and w1.shape[1] == E
    P = w2.shape[1]

    x_itemsize = x.dtype.itemsize
    w_itemsize = w1.dtype.itemsize

    # ---- VMEM budget (generation-aware) ----
    cap = _vmem_capacity_bytes()
    vmem_limit = int(min(cap - (4 << 20), 100 << 20))
    # Resident (constant-index, still double-buffered) weights + biases.
    weight_bytes = 2 * ((2 * E * E + E * P) * w_itemsize
                        + (E + P) * b1.dtype.itemsize)
    block_budget = max(1 << 20, vmem_limit - weight_bytes - (6 << 20))

    # ---- L tile: full (padded) L when small, else a capped slab ----
    l_pad = _round_up(max(L, 1), 8)
    if tile_l is None:
        rows_cap = max(8, ((2 << 20) // max(1, E * x_itemsize)) // 8 * 8)
        tile_l = min(l_pad, 512, rows_cap)
    else:
        tile_l = min(_round_up(int(tile_l), 8), l_pad)
    n_l = pl.cdiv(L, tile_l)
    needs_mask = (n_l * tile_l) != L

    # ---- batch tile: spend remaining VMEM on batch rows ----
    per_row = 2 * tile_l * E * x_itemsize + 2 * 8 * E * 4   # x dbl-buf + scratch
    if batch_tile is None:
        TB = _choose_batch_tile(B, block_budget, per_row)
    else:
        TB = int(batch_tile)
        if TB > B:
            TB = B
        if TB < B and TB % 8 != 0:
            TB = max(8, (TB // 8) * 8)
    n_b = pl.cdiv(B, TB)

    # Pre-split w1 into its [max | avg] halves (static, wrapper-side).
    w1_max = w1[:E, :]
    w1_avg = w1[E:, :]
    b1_2d = b1.reshape(1, E)
    b2_2d = b2.reshape(1, P)

    max_dtype = x.dtype if x.dtype == jnp.bfloat16 else jnp.float32

    kernel = _make_router_kernel(L, tile_l, needs_mask, 1.0 / float(L))
    const = lambda b, l: (0, 0)

    out = pl.pallas_call(
        kernel,
        out_shape=jax.ShapeDtypeStruct((B, P), x.dtype),
        grid_spec=pltpu.PrefetchScalarGridSpec(
            num_scalar_prefetch=0,
            grid=(n_b, n_l),
            in_specs=[
                pl.BlockSpec((TB, tile_l, E), lambda b, l: (b, l, 0)),  # x (streamed)
                pl.BlockSpec((E, E), const),   # w1[:E]  (resident)
                pl.BlockSpec((E, E), const),   # w1[E:]  (resident)
                pl.BlockSpec((1, E), const),   # b1
                pl.BlockSpec((E, P), const),   # w2
                pl.BlockSpec((1, P), const),   # b2
            ],
            out_specs=pl.BlockSpec((TB, P), lambda b, l: (b, 0)),
            scratch_shapes=[
                pltpu.VMEM((TB, 8, E), jnp.float32),   # sublane-kept running sum
                pltpu.VMEM((TB, 8, E), max_dtype),     # sublane-kept running max
            ],
        ),
        compiler_params=pltpu.CompilerParams(
            dimension_semantics=("parallel", "arbitrary"),
            vmem_limit_bytes=vmem_limit,
        ),
    )(x, w1_max, w1_avg, b1_2d, w2, b2_2d)
    return out


def router_reference(x, w1, b1, w2, b2):
    avg_out = jnp.mean(x, axis=1)
    max_out = jnp.max(x, axis=1)
    feats = jnp.concatenate([max_out, avg_out], axis=-1)
    h = feats @ w1 + b1
    out = h @ w2 + b2
    return jnp.maximum(jnp.tanh(out), 0.0)


if __name__ == "__main__":
    # Small shapes consistent with the module; L chosen so the tiled path with
    # a partial (masked) last tile is exercised.
    B, L, E = 2, 20, 32
    num_out_path = 4

    key = jax.random.PRNGKey(0)
    kx, k1, k2, k3, k4 = jax.random.split(key, 5)

    x = jax.random.normal(kx, (B, L, E), dtype=jnp.float32)

    # Deterministic parameter init (PyTorch-Linear-style uniform bounds).
    bound1 = 1.0 / jnp.sqrt(2.0 * E)
    w1 = jax.random.uniform(k1, (2 * E, E), jnp.float32, -bound1, bound1)
    b1 = jax.random.uniform(k2, (E,), jnp.float32, -bound1, bound1)
    bound2 = 1.0 / jnp.sqrt(1.0 * E)
    w2 = jax.random.uniform(k3, (E, num_out_path), jnp.float32, -bound2, bound2)
    b2 = jax.random.uniform(k4, (num_out_path,), jnp.float32, -bound2, bound2)

    ref = router_reference(x, w1, b1, w2, b2)

    # Default tiling: whole (padded) L in one tile, whole batch in one block.
    out_auto = jax.block_until_ready(router_forward(x, w1, b1, w2, b2))
    # Multi-L-tile path: grid over L with a partial (masked) last tile.
    out_tiled = jax.block_until_ready(router_forward(x, w1, b1, w2, b2, tile_l=8))

    assert out_auto.shape == (B, num_out_path)
    assert jnp.allclose(out_auto, ref, atol=1e-5, rtol=1e-5), "auto mismatch vs reference"
    assert jnp.allclose(out_tiled, ref, atol=1e-5, rtol=1e-5), "tiled mismatch vs reference"

    print("KERNEL_OK")
</pallas_src>

<mosaic_0001>
module attributes {stable_mosaic.version = 11 : i64} {
  func.func @kernel(%arg0: i32, %arg1: i32, %arg2: memref<2x24x32xf32, #tpu.memory_space<vmem>>, %arg3: memref<32x32xf32, #tpu.memory_space<vmem>>, %arg4: memref<32x32xf32, #tpu.memory_space<vmem>>, %arg5: memref<1x32xf32, #tpu.memory_space<vmem>>, %arg6: memref<32x4xf32, #tpu.memory_space<vmem>>, %arg7: memref<1x4xf32, #tpu.memory_space<vmem>>, %arg8: memref<2x4xf32, #tpu.memory_space<vmem>>, %arg9: memref<2x8x32xf32, #tpu.memory_space<vmem>>, %arg10: memref<2x8x32xf32, #tpu.memory_space<vmem>>) attributes {dimension_semantics = [#tpu.dimension_semantics<parallel>, #tpu.dimension_semantics<arbitrary>], iteration_bounds = array<i64: 1, 1>, scalar_prefetch = 0 : i64, scratch_operands = 2 : i64, tpu.core_type = #tpu.core_type<tc>, window_params = [{transform_indices = @transform_0, window_bounds = array<i64: 2, 24, 32>}, {pipeline_mode = #tpu.pipeline_mode<synchronous>, transform_indices = @transform_1, window_bounds = array<i64: 32, 32>}, {pipeline_mode = #tpu.pipeline_mode<synchronous>, transform_indices = @transform_2, window_bounds = array<i64: 32, 32>}, {pipeline_mode = #tpu.pipeline_mode<synchronous>, transform_indices = @transform_3, window_bounds = array<i64: 1, 32>}, {pipeline_mode = #tpu.pipeline_mode<synchronous>, transform_indices = @transform_4, window_bounds = array<i64: 32, 4>}, {pipeline_mode = #tpu.pipeline_mode<synchronous>, transform_indices = @transform_5, window_bounds = array<i64: 1, 4>}, {transform_indices = @transform_6, window_bounds = array<i64: 2, 4>}]} {
    %c0_i32 = arith.constant 0 : i32
    %0 = arith.cmpi eq, %arg1, %c0_i32 : i32
    %1 = arith.extui %0 : i1 to i32
    %c0_i32_0 = arith.constant 0 : i32
    %2 = arith.cmpi ne, %1, %c0_i32_0 : i32
    scf.if %2 {
      %cst = arith.constant 0.000000e+00 : f32
      %12 = vector.broadcast %cst : f32 to vector<2x8x32xf32>
      %c0 = arith.constant 0 : index
      %c0_7 = arith.constant 0 : index
      %c0_8 = arith.constant 0 : index
      %13 = vector.load %arg9[%c0, %c0_7, %c0_8] : memref<2x8x32xf32, #tpu.memory_space<vmem>>, vector<2x8x32xf32>
      tpu.vector_store %arg9[%c0, %c0_7, %c0_8], %12 {strides = array<i32>} : memref<2x8x32xf32, #tpu.memory_space<vmem>>, vector<2x8x32xf32>,
      %cst_9 = arith.constant 0xFF800000 : f32
      %14 = vector.broadcast %cst_9 : f32 to vector<2x8x32xf32>
      %c0_10 = arith.constant 0 : index
      %c0_11 = arith.constant 0 : index
      %c0_12 = arith.constant 0 : index
      %15 = vector.load %arg10[%c0_10, %c0_11, %c0_12] : memref<2x8x32xf32, #tpu.memory_space<vmem>>, vector<2x8x32xf32>
      tpu.vector_store %arg10[%c0_10, %c0_11, %c0_12], %14 {strides = array<i32>} : memref<2x8x32xf32, #tpu.memory_space<vmem>>, vector<2x8x32xf32>,
    } else {
    }
    %c0_i32_1 = arith.constant 0 : i32
    %3 = arith.cmpi slt, %arg1, %c0_i32_1 : i32
    %4 = arith.extui %3 : i1 to i32
    %c0_i32_2 = arith.constant 0 : i32
    %5 = arith.cmpi ne, %4, %c0_i32_2 : i32
    scf.if %5 {
      %c0 = arith.constant 0 : index
      %c0_7 = arith.constant 0 : index
      %c0_8 = arith.constant 0 : index
      %12 = vector.load %arg2[%c0, %c0_7, %c0_8] : memref<2x24x32xf32, #tpu.memory_space<vmem>>, vector<2x24x32xf32>
      %c0_9 = arith.constant 0 : index
      %c0_10 = arith.constant 0 : index
      %c0_11 = arith.constant 0 : index
      %13 = vector.load %arg9[%c0_9, %c0_10, %c0_11] : memref<2x8x32xf32, #tpu.memory_space<vmem>>, vector<2x8x32xf32>
      %c0_12 = arith.constant 0 : index
      %c0_13 = arith.constant 0 : index
      %c0_14 = arith.constant 0 : index
      %14 = vector.load %arg10[%c0_12, %c0_13, %c0_14] : memref<2x8x32xf32, #tpu.memory_space<vmem>>, vector<2x8x32xf32>
      %15 = vector.extract_strided_slice %12 {offsets = [0, 0, 0], sizes = [2, 8, 32], strides = [1, 1, 1]} : vector<2x24x32xf32> to vector<2x8x32xf32>
      %16 = arith.addf %13, %15 : vector<2x8x32xf32>
      %17 = vector.extract_strided_slice %12 {offsets = [0, 0, 0], sizes = [2, 8, 32], strides = [1, 1, 1]} : vector<2x24x32xf32> to vector<2x8x32xf32>
      %18 = arith.maximumf %14, %17 : vector<2x8x32xf32>
      %19 = vector.extract_strided_slice %12 {offsets = [0, 8, 0], sizes = [2, 8, 32], strides = [1, 1, 1]} : vector<2x24x32xf32> to vector<2x8x32xf32>
      %20 = arith.addf %16, %19 : vector<2x8x32xf32>
      %21 = vector.extract_strided_slice %12 {offsets = [0, 8, 0], sizes = [2, 8, 32], strides = [1, 1, 1]} : vector<2x24x32xf32> to vector<2x8x32xf32>
      %22 = arith.maximumf %18, %21 : vector<2x8x32xf32>
      %23 = vector.extract_strided_slice %12 {offsets = [0, 16, 0], sizes = [2, 8, 32], strides = [1, 1, 1]} : vector<2x24x32xf32> to vector<2x8x32xf32>
      %24 = arith.addf %20, %23 : vector<2x8x32xf32>
      %25 = vector.extract_strided_slice %12 {offsets = [0, 16, 0], sizes = [2, 8, 32], strides = [1, 1, 1]} : vector<2x24x32xf32> to vector<2x8x32xf32>
      %26 = arith.maximumf %22, %25 : vector<2x8x32xf32>
      %c0_15 = arith.constant 0 : index
      %c0_16 = arith.constant 0 : index
      %c0_17 = arith.constant 0 : index
      %27 = vector.load %arg9[%c0_15, %c0_16, %c0_17] : memref<2x8x32xf32, #tpu.memory_space<vmem>>, vector<2x8x32xf32>
      tpu.vector_store %arg9[%c0_15, %c0_16, %c0_17], %24 {strides = array<i32>} : memref<2x8x32xf32, #tpu.memory_space<vmem>>, vector<2x8x32xf32>,
      %c0_18 = arith.constant 0 : index
      %c0_19 = arith.constant 0 : index
      %c0_20 = arith.constant 0 : index
      %28 = vector.load %arg10[%c0_18, %c0_19, %c0_20] : memref<2x8x32xf32, #tpu.memory_space<vmem>>, vector<2x8x32xf32>
      tpu.vector_store %arg10[%c0_18, %c0_19, %c0_20], %26 {strides = array<i32>} : memref<2x8x32xf32, #tpu.memory_space<vmem>>, vector<2x8x32xf32>,
    } else {
    }
    %c0_i32_3 = arith.constant 0 : i32
    %6 = arith.cmpi eq, %arg1, %c0_i32_3 : i32
    %7 = arith.extui %6 : i1 to i32
    %c0_i32_4 = arith.constant 0 : i32
    %8 = arith.cmpi ne, %7, %c0_i32_4 : i32
    scf.if %8 {
      %c0 = arith.constant 0 : index
      %c0_7 = arith.constant 0 : index
      %c0_8 = arith.constant 0 : index
      %12 = vector.load %arg2[%c0, %c0_7, %c0_8] : memref<2x24x32xf32, #tpu.memory_space<vmem>>, vector<2x24x32xf32>
      %13 = tpu.iota {dimensions = array<i32: 1>} : vector<1x24x1xi32>
      %c24_i32 = arith.constant 24 : i32
      %14 = arith.muli %arg1, %c24_i32 : i32
      %15 = vector.broadcast %14 : i32 to vector<1x24x1xi32>
      %16 = arith.addi %13, %15 : vector<1x24x1xi32>
      %c20_i32 = arith.constant 20 : i32
      %17 = vector.broadcast %c20_i32 : i32 to vector<1x24x1xi32>
      %18 = arith.cmpi slt, %16, %17 : vector<1x24x1xi32>
      %cst = arith.constant 0.000000e+00 : f32
      %19 = vector.shape_cast %18 : vector<1x24x1xi1> to vector<1x24x1xi1>
      %20 = vector.broadcast %19 : vector<1x24x1xi1> to vector<2x24x32xi1>
      %21 = vector.broadcast %cst : f32 to vector<2x24x32xf32>
      %22 = arith.select %20, %12, %21 : vector<2x24x32xi1>, vector<2x24x32xf32>
      %cst_9 = arith.constant 0xFF800000 : f32
      %23 = vector.shape_cast %18 : vector<1x24x1xi1> to vector<1x24x1xi1>
      %24 = vector.broadcast %23 : vector<1x24x1xi1> to vector<2x24x32xi1>
      %25 = vector.broadcast %cst_9 : f32 to vector<2x24x32xf32>
      %26 = arith.select %24, %12, %25 : vector<2x24x32xi1>, vector<2x24x32xf32>
      %c0_10 = arith.constant 0 : index
      %c0_11 = arith.constant 0 : index
      %c0_12 = arith.constant 0 : index
      %27 = vector.load %arg9[%c0_10, %c0_11, %c0_12] : memref<2x8x32xf32, #tpu.memory_space<vmem>>, vector<2x8x32xf32>
      %c0_13 = arith.constant 0 : index
      %c0_14 = arith.constant 0 : index
      %c0_15 = arith.constant 0 : index
      %28 = vector.load %arg10[%c0_13, %c0_14, %c0_15] : memref<2x8x32xf32, #tpu.memory_space<vmem>>, vector<2x8x32xf32>
      %29 = vector.extract_strided_slice %22 {offsets = [0, 0, 0], sizes = [2, 8, 32], strides = [1, 1, 1]} : vector<2x24x32xf32> to vector<2x8x32xf32>
      %30 = arith.addf %27, %29 : vector<2x8x32xf32>
      %31 = vector.extract_strided_slice %26 {offsets = [0, 0, 0], sizes = [2, 8, 32], strides = [1, 1, 1]} : vector<2x24x32xf32> to vector<2x8x32xf32>
      %32 = arith.maximumf %28, %31 : vector<2x8x32xf32>
      %33 = vector.extract_strided_slice %22 {offsets = [0, 8, 0], sizes = [2, 8, 32], strides = [1, 1, 1]} : vector<2x24x32xf32> to vector<2x8x32xf32>
      %34 = arith.addf %30, %33 : vector<2x8x32xf32>
      %35 = vector.extract_strided_slice %26 {offsets = [0, 8, 0], sizes = [2, 8, 32], strides = [1, 1, 1]} : vector<2x24x32xf32> to vector<2x8x32xf32>
      %36 = arith.maximumf %32, %35 : vector<2x8x32xf32>
      %37 = vector.extract_strided_slice %22 {offsets = [0, 16, 0], sizes = [2, 8, 32], strides = [1, 1, 1]} : vector<2x24x32xf32> to vector<2x8x32xf32>
      %38 = arith.addf %34, %37 : vector<2x8x32xf32>
      %39 = vector.extract_strided_slice %26 {offsets = [0, 16, 0], sizes = [2, 8, 32], strides = [1, 1, 1]} : vector<2x24x32xf32> to vector<2x8x32xf32>
      %40 = arith.maximumf %36, %39 : vector<2x8x32xf32>
      %c0_16 = arith.constant 0 : index
      %c0_17 = arith.constant 0 : index
      %c0_18 = arith.constant 0 : index
      %41 = vector.load %arg9[%c0_16, %c0_17, %c0_18] : memref<2x8x32xf32, #tpu.memory_space<vmem>>, vector<2x8x32xf32>
      tpu.vector_store %arg9[%c0_16, %c0_17, %c0_18], %38 {strides = array<i32>} : memref<2x8x32xf32, #tpu.memory_space<vmem>>, vector<2x8x32xf32>,
      %c0_19 = arith.constant 0 : index
      %c0_20 = arith.constant 0 : index
      %c0_21 = arith.constant 0 : index
      %42 = vector.load %arg10[%c0_19, %c0_20, %c0_21] : memref<2x8x32xf32, #tpu.memory_space<vmem>>, vector<2x8x32xf32>
      tpu.vector_store %arg10[%c0_19, %c0_20, %c0_21], %40 {strides = array<i32>} : memref<2x8x32xf32, #tpu.memory_space<vmem>>, vector<2x8x32xf32>,
    } else {
    }
    %c0_i32_5 = arith.constant 0 : i32
    %9 = arith.cmpi eq, %arg1, %c0_i32_5 : i32
    %10 = arith.extui %9 : i1 to i32
    %c0_i32_6 = arith.constant 0 : i32
    %11 = arith.cmpi ne, %10, %c0_i32_6 : i32
    scf.if %11 {
      %c0 = arith.constant 0 : index
      %c0_7 = arith.constant 0 : index
      %c0_8 = arith.constant 0 : index
      %12 = vector.load %arg9[%c0, %c0_7, %c0_8] : memref<2x8x32xf32, #tpu.memory_space<vmem>>, vector<2x8x32xf32>
      %cst = arith.constant dense<0.000000e+00> : vector<2x32xf32>
      %13 = vector.multi_reduction <add>, %12, %cst [1] : vector<2x8x32xf32> to vector<2x32xf32>
      %cst_9 = arith.constant 5.000000e-02 : f32
      %14 = vector.broadcast %cst_9 : f32 to vector<2x32xf32>
      %15 = arith.mulf %13, %14 : vector<2x32xf32>
      %c0_10 = arith.constant 0 : index
      %c0_11 = arith.constant 0 : index
      %c0_12 = arith.constant 0 : index
      %16 = vector.load %arg10[%c0_10, %c0_11, %c0_12] : memref<2x8x32xf32, #tpu.memory_space<vmem>>, vector<2x8x32xf32>
      %cst_13 = arith.constant dense<0xFF800000> : vector<2x32xf32>
      %17 = vector.multi_reduction <maximumf>, %16, %cst_13 [1] : vector<2x8x32xf32> to vector<2x32xf32>
      %c0_14 = arith.constant 0 : index
      %c0_15 = arith.constant 0 : index
      %18 = vector.load %arg3[%c0_14, %c0_15] : memref<32x32xf32, #tpu.memory_space<vmem>>, vector<32x32xf32>
      %cst_16 = arith.constant dense<0.000000e+00> : vector<2x32xf32>
      %19 = tpu.matmul %17, %18, %cst_16 {dimension_numbers = #tpu.dot_dimension_numbers<[1], [0], [0], [1], [0, 0, 1, 1], [], []>} : vector<2x32xf32>, vector<32x32xf32>, vector<2x32xf32> -> vector<2x32xf32>
      %c0_17 = arith.constant 0 : index
      %c0_18 = arith.constant 0 : index
      %20 = vector.load %arg4[%c0_17, %c0_18] : memref<32x32xf32, #tpu.memory_space<vmem>>, vector<32x32xf32>
      %cst_19 = arith.constant dense<0.000000e+00> : vector<2x32xf32>
      %21 = tpu.matmul %15, %20, %cst_19 {dimension_numbers = #tpu.dot_dimension_numbers<[1], [0], [0], [1], [0, 0, 1, 1], [], []>} : vector<2x32xf32>, vector<32x32xf32>, vector<2x32xf32> -> vector<2x32xf32>
      %22 = arith.addf %19, %21 : vector<2x32xf32>
      %c0_20 = arith.constant 0 : index
      %c0_21 = arith.constant 0 : index
      %23 = vector.load %arg5[%c0_20, %c0_21] : memref<1x32xf32, #tpu.memory_space<vmem>>, vector<1x32xf32>
      %24 = vector.broadcast %23 : vector<1x32xf32> to vector<2x32xf32>
      %25 = arith.addf %22, %24 : vector<2x32xf32>
      %c0_22 = arith.constant 0 : index
      %c0_23 = arith.constant 0 : index
      %26 = vector.load %arg6[%c0_22, %c0_23] : memref<32x4xf32, #tpu.memory_space<vmem>>, vector<32x4xf32>
      %cst_24 = arith.constant dense<0.000000e+00> : vector<2x4xf32>
      %27 = tpu.matmul %25, %26, %cst_24 {dimension_numbers = #tpu.dot_dimension_numbers<[1], [0], [0], [1], [0, 0, 1, 1], [], []>} : vector<2x32xf32>, vector<32x4xf32>, vector<2x4xf32> -> vector<2x4xf32>
      %c0_25 = arith.constant 0 : index
      %c0_26 = arith.constant 0 : index
      %28 = vector.load %arg7[%c0_25, %c0_26] : memref<1x4xf32, #tpu.memory_space<vmem>>, vector<1x4xf32>
      %29 = vector.broadcast %28 : vector<1x4xf32> to vector<2x4xf32>
      %30 = arith.addf %27, %29 : vector<2x4xf32>
      %31 = math.tanh %30 : vector<2x4xf32>
      %cst_27 = arith.constant 0.000000e+00 : f32
      %32 = vector.broadcast %cst_27 : f32 to vector<2x4xf32>
      %33 = arith.maximumf %31, %32 : vector<2x4xf32>
      %c0_28 = arith.constant 0 : index
      %c0_29 = arith.constant 0 : index
      %34 = vector.load %arg8[%c0_28, %c0_29] : memref<2x4xf32, #tpu.memory_space<vmem>>, vector<2x4xf32>
      tpu.vector_store %arg8[%c0_28, %c0_29], %33 {strides = array<i32>} : memref<2x4xf32, #tpu.memory_space<vmem>>, vector<2x4xf32>,
    } else {
    }
    return
  }
  func.func @transform_0(%arg0: i32, %arg1: i32) -> (i32, i32, i32) {
    %c0_i32 = arith.constant 0 : i32
    %c0_i32_0 = arith.constant 0 : i32
    return %arg0, %arg1, %c0_i32 : i32, i32, i32
  }
  func.func @transform_1(%arg0: i32, %arg1: i32) -> (i32, i32) {
    %c0_i32 = arith.constant 0 : i32
    %c0_i32_0 = arith.constant 0 : i32
    %c0_i32_1 = arith.constant 0 : i32
    return %c0_i32, %c0_i32_0 : i32, i32
  }
  func.func @transform_2(%arg0: i32, %arg1: i32) -> (i32, i32) {
    %c0_i32 = arith.constant 0 : i32
    %c0_i32_0 = arith.constant 0 : i32
    %c0_i32_1 = arith.constant 0 : i32
    return %c0_i32, %c0_i32_0 : i32, i32
  }
  func.func @transform_3(%arg0: i32, %arg1: i32) -> (i32, i32) {
    %c0_i32 = arith.constant 0 : i32
    %c0_i32_0 = arith.constant 0 : i32
    %c0_i32_1 = arith.constant 0 : i32
    return %c0_i32, %c0_i32_0 : i32, i32
  }
  func.func @transform_4(%arg0: i32, %arg1: i32) -> (i32, i32) {
    %c0_i32 = arith.constant 0 : i32
    %c0_i32_0 = arith.constant 0 : i32
    %c0_i32_1 = arith.constant 0 : i32
    return %c0_i32, %c0_i32_0 : i32, i32
  }
  func.func @transform_5(%arg0: i32, %arg1: i32) -> (i32, i32) {
    %c0_i32 = arith.constant 0 : i32
    %c0_i32_0 = arith.constant 0 : i32
    %c0_i32_1 = arith.constant 0 : i32
    return %c0_i32, %c0_i32_0 : i32, i32
  }
  func.func @transform_6(%arg0: i32, %arg1: i32) -> (i32, i32) {
    %c0_i32 = arith.constant 0 : i32
    %c0_i32_0 = arith.constant 0 : i32
    return %arg0, %c0_i32 : i32, i32
  }
}

</mosaic_0001>

<llo_original>
// kernel: tpu_custom_call.1
$region0: #{tpu_custom_call.1}
  #allocation0 [shape = 'u32[]', space=smem, size = 0x4, offset = 0x4, fixed_abs, tag = 'smem constant byte address 0x4 - core index']
  #allocation1 [shape = 'u32[144,128]{1,0:T(1,128)}', space=vmem, size = 0x12000, scoped, tag = 'internal scratch']
  #allocation2 [shape = 'f32[2,8,32]{2,1,0:T(8,128)}', space=vmem, size = 0x2000, scoped, tag = 'scratch operand']
  #allocation3 [shape = 'f32[2,8,32]{2,1,0:T(8,128)}', space=vmem, size = 0x2000, scoped, tag = 'scratch operand']
  %s0 = inlined_call_operand.vmem [shape: f32[2,20,32], index: 0, kind: input, shape index: {}]
  %s1 = inlined_call_operand.vmem [shape: f32[32,32], index: 1, kind: input, shape index: {}]
  %s2 = inlined_call_operand.vmem [shape: f32[32,32], index: 2, kind: input, shape index: {}]
  %s3 = inlined_call_operand.vmem [shape: f32[1,32], index: 3, kind: input, shape index: {}]
  %s4 = inlined_call_operand.vmem [shape: f32[32,4], index: 4, kind: input, shape index: {}]
  %s5 = inlined_call_operand.vmem [shape: f32[1,4], index: 5, kind: input, shape index: {}]
  %s6 = inlined_call_operand.hbm [shape: f32[2,4], index: 6, kind: output, shape index: {}]
  %s7 = sld [smem:[#allocation0]]
  $region46: #{tpu_custom_call.1} parent=0
    _
  %s9 = ssub.s32 1, %s7
  %s10 = scalar_select 0, %s9, %s7
  $region1: #{tpu_custom_call.1} parent=0
    #allocation4 [shape = 'u8[1024]{0}', space=vmem, size = 0x400, scoped, tag = 'output window, operand 0, single buffered']
    #allocation5 [shape = 's32[1]{0}', space=sflag, size = 0x4, scoped, tag = 'scoped memory for tpu_custom_call.1']
    %11 = vsyncpa [#allocation5], 0
    // Predicated region
    $region2: #{tpu_custom_call.1} parent=1 // pred_check
      _
    $region3: #{tpu_custom_call.1} parent=1 // pred_check_branch
      %13 = sbr.rel (0) target = $region5
    $region4: #{tpu_custom_call.1} parent=1 // pred_region
      _
    $region5: #{tpu_custom_call.1} parent=1 // pred_fallthru
      _
    // Predicated region
    $region6: #{tpu_custom_call.1} parent=1 // pred_check
      _
    $region7: #{tpu_custom_call.1} parent=1 // pred_check_branch
      %15 = sbr.rel (0) target = $region9
    $region8: #{tpu_custom_call.1} parent=1 // pred_region
      _
    $region9: #{tpu_custom_call.1} parent=1 // pred_fallthru
      _
    // Predicated region
    $region10: #{tpu_custom_call.1} parent=1 // pred_check
      _
    $region11: #{tpu_custom_call.1} parent=1 // pred_check_branch
      %17 = sbr.rel (0) target = $region13
    $region12: #{tpu_custom_call.1} parent=1 // pred_region
      _
    $region13: #{tpu_custom_call.1} parent=1 // pred_fallthru
      _
    // Predicated region
    $region14: #{tpu_custom_call.1} parent=1 // pred_check
      _
    $region15: #{tpu_custom_call.1} parent=1 // pred_check_branch
      %19 = sbr.rel (0) target = $region17
    $region16: #{tpu_custom_call.1} parent=1 // pred_region
      _
    $region17: #{tpu_custom_call.1} parent=1 // pred_fallthru
      _
    // Predicated region
    $region18: #{tpu_custom_call.1} parent=1 // pred_check
      _
    $region19: #{tpu_custom_call.1} parent=1 // pred_check_branch
      %21 = sbr.rel (0) target = $region21
    $region20: #{tpu_custom_call.1} parent=1 // pred_region
      _
    $region21: #{tpu_custom_call.1} parent=1 // pred_fallthru
      _
    // Predicated region
    $region22: #{tpu_custom_call.1} parent=1 // pred_check
      _
    $region23: #{tpu_custom_call.1} parent=1 // pred_check_branch
      %23 = sbr.rel (0) target = $region25
    $region24: #{tpu_custom_call.1} parent=1 // pred_region
      _
    $region25: #{tpu_custom_call.1} parent=1 // pred_fallthru
      _
    %p24 = scmp.eq.s32.totalorder 0, 0
    // Predicated region
    $region26: #{tpu_custom_call.1} parent=1 // pred_check
      %p25 = pneg %p24
    $region27: #{tpu_custom_call.1} parent=1 // pred_check_branch
      %27 = sbr.rel (%p25) target = $region29
    $region28: #{tpu_custom_call.1} parent=1 // pred_region
      %vm28 = vcmask 261120
      %29 = vst.msk [vmem:[#allocation2] sm:$0xff] %vm28, 0.0
      %30 = vst.msk [vmem:[#allocation2 + $0x8] sm:$0xff] %vm28, 0.0
      %31 = vst.msk [vmem:[#allocation3] sm:$0xff] %vm28, -inf
      %32 = vst.msk [vmem:[#allocation3 + $0x8] sm:$0xff] %vm28, -inf
    $region29: #{tpu_custom_call.1} parent=1 // pred_fallthru
      _
    %p33 = scmp.lt.s32.totalorder 0, 0
    // Predicated region
    $region30: #{tpu_custom_call.1} parent=1 // pred_check
      %p34 = pneg %p33
    $region31: #{tpu_custom_call.1} parent=1 // pred_check_branch
      %36 = sbr.rel (%p34) target = $region33
    $region32: #{tpu_custom_call.1} parent=1 // pred_region
      %v37 = vld [vmem:[%s0] sm:$0xff]
      %v38 = vld [vmem:[%s0 + $0x8] sm:$0xff]
      %v39 = vld [vmem:[%s0 + $0x10] sm:$0xff]
      %v40 = vld [vmem:[%s0 + $0x18] sm:$0xff]
      %v41 = vld [vmem:[%s0 + $0x20] sm:$0xff]
      %v42 = vld [vmem:[%s0 + $0x28] sm:$0xff]
      %v43 = vld [vmem:[#allocation2] sm:$0xff]
      %v44 = vld [vmem:[#allocation2 + $0x8] sm:$0xff]
      %v45 = vld [vmem:[#allocation3] sm:$0xff]
      %v46 = vld [vmem:[#allocation3 + $0x8] sm:$0xff]
      %v47 = vadd.f32 %v43, %v37
      %v48 = vadd.f32 %v44, %v40
      %v49 = vmax.f32 %v45, %v37
      %v50 = vmax.f32 %v46, %v40
      %v51 = vadd.f32 %v47, %v38
      %v52 = vadd.f32 %v48, %v41
      %v53 = vmax.f32 %v49, %v38
      %v54 = vmax.f32 %v50, %v41
      %v55 = vadd.f32 %v51, %v39
      %v56 = vadd.f32 %v52, %v42
      %v57 = vmax.f32 %v53, %v39
      %v58 = vmax.f32 %v54, %v42
      %vm59 = vcmask 261120
      %60 = vst.msk [vmem:[#allocation2] sm:$0xff] %vm59, %v55
      %61 = vst.msk [vmem:[#allocation2 + $0x8] sm:$0xff] %vm59, %v56
      %62 = vst.msk [vmem:[#allocation3] sm:$0xff] %vm59, %v57
      %63 = vst.msk [vmem:[#allocation3 + $0x8] sm:$0xff] %vm59, %v58
    $region33: #{tpu_custom_call.1} parent=1 // pred_fallthru
      _
    // Predicated region
    $region34: #{tpu_custom_call.1} parent=1 // pred_check
      %p64 = pneg %p24
    $region35: #{tpu_custom_call.1} parent=1 // pred_check_branch
      %66 = sbr.rel (%p64) target = $region37
    $region36: #{tpu_custom_call.1} parent=1 // pred_region
      %v67 = vld [vmem:[%s0] sm:$0xff]
      %v68 = vld [vmem:[%s0 + $0x8] sm:$0xff]
      %v69 = vld [vmem:[%s0 + $0x10] sm:$0xff]
      %v70 = vld [vmem:[%s0 + $0x18] sm:$0xff]
      %v71 = vld [vmem:[%s0 + $0x20] sm:$0xff]
      %v72 = vld [vmem:[%s0 + $0x28] sm:$0xff]
      %v73 = vlaneseq
      %v74 = vshrl.u32 %v73, 7
      %v75 = vadd.s32 %v74, 8
      %v76 = vadd.s32 %v74, 16
      %s77 = smul.u32 0, 24
      %v78 = vstv %s77
      %v79 = vadd.s32 %v74, %v78
      %v80 = vadd.s32 %v75, %v78
      %v81 = vadd.s32 %v76, %v78
      %vm82 = vcmp.lt.s32.totalorder %v79, 20
      %vm83 = vcmp.lt.s32.totalorder %v80, 20
      %vm84 = vcmp.lt.s32.totalorder %v81, 20
      %v85 = vsel %vm82, 1, 0
      %v86 = vsel %vm83, 1, 0
      %v87 = vsel %vm84, 1, 0
      %vm88 = vcmp.eq.s32.totalorder %v85, 1
      %vm89 = vcmp.eq.s32.totalorder %v86, 1
      %vm90 = vcmp.eq.s32.totalorder %v87, 1
      %v91 = vsel %vm88, %v67, 0.0
      %v92 = vsel %vm89, %v68, 0.0
      %v93 = vsel %vm90, %v69, 0.0
      %v94 = vsel %vm88, %v70, 0.0
      %v95 = vsel %vm89, %v71, 0.0
      %v96 = vsel %vm90, %v72, 0.0
      %v97 = vsel %vm88, %v67, -inf
      %v98 = vsel %vm89, %v68, -inf
      %v99 = vsel %vm90, %v69, -inf
      %v100 = vsel %vm88, %v70, -inf
      %v101 = vsel %vm89, %v71, -inf
      %v102 = vsel %vm90, %v72, -inf
      %v103 = vld [vmem:[#allocation2] sm:$0xff]
      %v104 = vld [vmem:[#allocation2 + $0x8] sm:$0xff]
      %v105 = vld [vmem:[#allocation3] sm:$0xff]
      %v106 = vld [vmem:[#allocation3 + $0x8] sm:$0xff]
      %v107 = vadd.f32 %v103, %v91
      %v108 = vadd.f32 %v104, %v94
      %v109 = vmax.f32 %v105, %v97
      %v110 = vmax.f32 %v106, %v100
      %v111 = vadd.f32 %v107, %v92
      %v112 = vadd.f32 %v108, %v95
      %v113 = vmax.f32 %v109, %v98
      %v114 = vmax.f32 %v110, %v101
      %v115 = vadd.f32 %v111, %v93
      %v116 = vadd.f32 %v112, %v96
      %v117 = vmax.f32 %v113, %v99
      %v118 = vmax.f32 %v114, %v102
      %vm119 = vcmask 261120
      %120 = vst.msk [vmem:[#allocation2] sm:$0xff] %vm119, %v115
      %121 = vst.msk [vmem:[#allocation2 + $0x8] sm:$0xff] %vm119, %v116
      %122 = vst.msk [vmem:[#allocation3] sm:$0xff] %vm119, %v117
      %123 = vst.msk [vmem:[#allocation3 + $0x8] sm:$0xff] %vm119, %v118
      %v124 = vld [vmem:[#allocation2] sm:$0xff]
      %v125 = vld [vmem:[#allocation2 + $0x8] sm:$0xff]
      %v126 = vsel %vm119, %v124, 0.0
      %v127 = vrot.slane %v126, 4
      %v128 = vadd.f32 %v126, %v127
      %v129 = vrot.slane %v128, 2
      %v130 = vadd.f32 %v128, %v129
      %v131 = vrot.slane %v130, 1
      %v132 = vadd.f32 %v130, %v131
      %v133 = vsel %vm119, %v125, 0.0
      %v134 = vrot.slane %v133, 4
      %v135 = vadd.f32 %v133, %v134
      %v136 = vrot.slane %v135, 2
      %v137 = vadd.f32 %v135, %v136
      %v138 = vrot.slane %v137, 1
      %v139 = vadd.f32 %v137, %v138
      %v140 = vmul.f32 %v132, 0.05
      %v141 = vmul.f32 %v139, 0.05
      %v142 = vld [vmem:[#allocation3] sm:$0xff]
      %v143 = vld [vmem:[#allocation3 + $0x8] sm:$0xff]
      %v144 = vsel %vm119, %v142, -inf
      %v145 = vrot.slane %v144, 4
      %v146 = vmax.f32 %v144, %v145
      %v147 = vrot.slane %v146, 2
      %v148 = vmax.f32 %v146, %v147
      %v149 = vrot.slane %v148, 1
      %v150 = vmax.f32 %v148, %v149
      %v151 = vsel %vm119, %v143, -inf
      %v152 = vrot.slane %v151, 4
      %v153 = vmax.f32 %v151, %v152
      %v154 = vrot.slane %v153, 2
      %v155 = vmax.f32 %v153, %v154
      %v156 = vrot.slane %v155, 1
      %v157 = vmax.f32 %v155, %v156
      %v158 = vld [vmem:[%s1] sm:$0xff]
      %v159 = vld [vmem:[%s1 + $0x8] sm:$0xff]
      %v160 = vld [vmem:[%s1 + $0x10] sm:$0xff]
      %v161 = vld [vmem:[%s1 + $0x18] sm:$0xff]
      %v162 = vld [vmem:[%s2] sm:$0xff]
      %v163 = vld [vmem:[%s2 + $0x8] sm:$0xff]
      %v164 = vld [vmem:[%s2 + $0x10] sm:$0xff]
      %v165 = vld [vmem:[%s2 + $0x18] sm:$0xff]
      %vm168 = vcmask 1041409
      %v169 = vsel %vm168, %v141, %v140
      %v170 = vsel %vm119, %v169, 0
      %172 = vmatprep.subr.mxu0 0.0
      %173 = vmatpush1.msra.mxu0 0.0
      %174 = vmatprep.subr.mxu0 0.0
      %175 = vmatpush1.msra.mxu0 0.0
      %176 = vmatprep.subr.mxu0 0.0
      %177 = vmatpush1.msra.mxu0 0.0
      %178 = vmatprep.subr.mxu0 0.0
      %179 = vmatpush1.msra.mxu0 0.0
      %180 = vmatprep.subr.mxu0 0.0
      %181 = vmatpush1.msra.mxu0 0.0
      %182 = vmatprep.subr.mxu0 0.0
      %183 = vmatpush1.msra.mxu0 0.0
      %184 = vmatprep.subr.mxu0 0.0
      %185 = vmatpush1.msra.mxu0 0.0
      %186 = vmatprep.subr.mxu0 0.0
      %187 = vmatpush1.msra.mxu0 0.0
      %188 = vmatprep.subr.mxu0 0.0
      %189 = vmatpush1.msra.mxu0 0.0
      %190 = vmatprep.subr.mxu0 0.0
      %191 = vmatpush1.msra.mxu0 0.0
      %192 = vmatprep.subr.mxu0 0.0
      %193 = vmatpush1.msra.mxu0 0.0
      %194 = vmatprep.subr.mxu0 0.0
      %195 = vmatpush1.msra.mxu0 0.0
      %196 = vmatprep.subr.mxu0 0.0
      %197 = vmatpush1.msra.mxu0 %v165
      %198 = vmatprep.subr.mxu0 0.0
      %199 = vmatpush1.msra.mxu0 %v164
      %200 = vmatprep.subr.mxu0 0.0
      %201 = vmatpush1.msra.mxu0 %v163
      %202 = vmatprep.subr.mxu0 0.0
      %203 = vmatpush1.msra.mxu0 %v162
      %204 = vmatprep.subr.mxu0 0.0
      %205 = vmatpush2.msra.mxu0 0.0
      %206 = vmatprep.subr.mxu0 0.0
      %207 = vmatpush2.msra.mxu0 0.0
      %208 = vmatprep.subr.mxu0 0.0
      %209 = vmatpush2.msra.mxu0 0.0
      %210 = vmatprep.subr.mxu0 0.0
      %211 = vmatpush2.msra.mxu0 0.0
      %212 = vmatprep.subr.mxu0 0.0
      %213 = vmatpush2.msra.mxu0 0.0
      %214 = vmatprep.subr.mxu0 0.0
      %215 = vmatpush2.msra.mxu0 0.0
      %216 = vmatprep.subr.mxu0 0.0
      %217 = vmatpush2.msra.mxu0 0.0
      %218 = vmatprep.subr.mxu0 0.0
      %219 = vmatpush2.msra.mxu0 0.0
      %220 = vmatprep.subr.mxu0 0.0
      %221 = vmatpush2.msra.mxu0 0.0
      %222 = vmatprep.subr.mxu0 0.0
      %223 = vmatpush2.msra.mxu0 0.0
      %224 = vmatprep.subr.mxu0 0.0
      %225 = vmatpush2.msra.mxu0 0.0
      %226 = vmatprep.subr.mxu0 0.0
      %227 = vmatpush2.msra.mxu0 0.0
      %228 = vmatprep.subr.mxu0 0.0
      %229 = vmatpush2.msra.mxu0 0.0
      %230 = vmatprep.subr.mxu0 0.0
      %231 = vmatpush2.msra.mxu0 0.0
      %232 = vmatprep.subr.mxu0 0.0
      %233 = vmatpush2.msra.mxu0 0.0
      %234 = vmatprep.subr.mxu0 0.0
      %235 = vmatpush2.msra.mxu0 0.0
      %236 = vmatprep.mubr.f32.mxu0 0.0
      %237 = vmatmul.mubr.f32.gmra.mxu0 %v170
      %v238 = vpop.f32.mrf.mxu0
      %v239 = vadd.f32 0.0, %v238
      %v240 = vpop.f32.mrf.mxu0
      %241 = vdwg.mxu0
      %v244 = vsel %vm168, %v157, %v150
      %v245 = vsel %vm119, %v244, 0
      %247 = vmatprep.subr.mxu0 0.0
      %248 = vmatpush1.msra.mxu0 0.0
      %249 = vmatprep.subr.mxu0 0.0
      %250 = vmatpush1.msra.mxu0 0.0
      %251 = vmatprep.subr.mxu0 0.0
      %252 = vmatpush1.msra.mxu0 0.0
      %253 = vmatprep.subr.mxu0 0.0
      %254 = vmatpush1.msra.mxu0 0.0
      %255 = vmatprep.subr.mxu0 0.0
      %256 = vmatpush1.msra.mxu0 0.0
      %257 = vmatprep.subr.mxu0 0.0
      %258 = vmatpush1.msra.mxu0 0.0
      %259 = vmatprep.subr.mxu0 0.0
      %260 = vmatpush1.msra.mxu0 0.0
      %261 = vmatprep.subr.mxu0 0.0
      %262 = vmatpush1.msra.mxu0 0.0
      %263 = vmatprep.subr.mxu0 0.0
      %264 = vmatpush1.msra.mxu0 0.0
      %265 = vmatprep.subr.mxu0 0.0
      %266 = vmatpush1.msra.mxu0 0.0
      %267 = vmatprep.subr.mxu0 0.0
      %268 = vmatpush1.msra.mxu0 0.0
      %269 = vmatprep.subr.mxu0 0.0
      %270 = vmatpush1.msra.mxu0 0.0
      %271 = vmatprep.subr.mxu0 0.0
      %272 = vmatpush1.msra.mxu0 %v161
      %273 = vmatprep.subr.mxu0 0.0
      %274 = vmatpush1.msra.mxu0 %v160
      %275 = vmatprep.subr.mxu0 0.0
      %276 = vmatpush1.msra.mxu0 %v159
      %277 = vmatprep.subr.mxu0 0.0
      %278 = vmatpush1.msra.mxu0 %v158
      %279 = vmatprep.subr.mxu0 0.0
      %280 = vmatpush2.msra.mxu0 0.0
      %281 = vmatprep.subr.mxu0 0.0
      %282 = vmatpush2.msra.mxu0 0.0
      %283 = vmatprep.subr.mxu0 0.0
      %284 = vmatpush2.msra.mxu0 0.0
      %285 = vmatprep.subr.mxu0 0.0
      %286 = vmatpush2.msra.mxu0 0.0
      %287 = vmatprep.subr.mxu0 0.0
      %288 = vmatpush2.msra.mxu0 0.0
      %289 = vmatprep.subr.mxu0 0.0
      %290 = vmatpush2.msra.mxu0 0.0
      %291 = vmatprep.subr.mxu0 0.0
      %292 = vmatpush2.msra.mxu0 0.0
      %293 = vmatprep.subr.mxu0 0.0
      %294 = vmatpush2.msra.mxu0 0.0
      %295 = vmatprep.subr.mxu0 0.0
      %296 = vmatpush2.msra.mxu0 0.0
      %297 = vmatprep.subr.mxu0 0.0
      %298 = vmatpush2.msra.mxu0 0.0
      %299 = vmatprep.subr.mxu0 0.0
      %300 = vmatpush2.msra.mxu0 0.0
      %301 = vmatprep.subr.mxu0 0.0
      %302 = vmatpush2.msra.mxu0 0.0
      %303 = vmatprep.subr.mxu0 0.0
      %304 = vmatpush2.msra.mxu0 0.0
      %305 = vmatprep.subr.mxu0 0.0
      %306 = vmatpush2.msra.mxu0 0.0
      %307 = vmatprep.subr.mxu0 0.0
      %308 = vmatpush2.msra.mxu0 0.0
      %309 = vmatprep.subr.mxu0 0.0
      %310 = vmatpush2.msra.mxu0 0.0
      %311 = vmatprep.mubr.f32.mxu0 0.0
      %312 = vmatmul.mubr.f32.gmra.mxu0 %v245
      %v313 = vpop.f32.mrf.mxu0
      %v314 = vadd.f32 %v239, %v313
      %v315 = vpop.f32.mrf.mxu0
      %316 = vdwg.mxu0
      %v317 = vld [vmem:[%s3] sm:$0x1]
      %v319 = vlaneseq
      %v320 = vshrl.u32 %v319, 7
      %v321 = vsub.s32 0, %v320
      %v322 = vrot.slane %v317, %v321
      %v324 = vadd.f32 %v314, %v322
      %v325 = vld [vmem:[%s4] sm:$0xff]
      %v326 = vld [vmem:[%s4 + $0x8] sm:$0xff]
      %v327 = vld [vmem:[%s4 + $0x10] sm:$0xff]
      %v328 = vld [vmem:[%s4 + $0x18] sm:$0xff]
      %v329 = vld [vmem:[%s5] sm:$0x1]
      %v331 = vlaneseq
      %v332 = vshrl.u32 %v331, 7
      %v333 = vsub.s32 0, %v332
      %v334 = vrot.slane %v329, %v333
      %v337 = vsel %vm119, %v324, 0
      %339 = vmatprep.subr.mxu0 0.0
      %340 = vmatpush1.msra.mxu0 0.0
      %341 = vmatprep.subr.mxu0 0.0
      %342 = vmatpush1.msra.mxu0 0.0
      %343 = vmatprep.subr.mxu0 0.0
      %344 = vmatpush1.msra.mxu0 0.0
      %345 = vmatprep.subr.mxu0 0.0
      %346 = vmatpush1.msra.mxu0 0.0
      %347 = vmatprep.subr.mxu0 0.0
      %348 = vmatpush1.msra.mxu0 0.0
      %349 = vmatprep.subr.mxu0 0.0
      %350 = vmatpush1.msra.mxu0 0.0
      %351 = vmatprep.subr.mxu0 0.0
      %352 = vmatpush1.msra.mxu0 0.0
      %353 = vmatprep.subr.mxu0 0.0
      %354 = vmatpush1.msra.mxu0 0.0
      %355 = vmatprep.subr.mxu0 0.0
      %356 = vmatpush1.msra.mxu0 0.0
      %357 = vmatprep.subr.mxu0 0.0
      %358 = vmatpush1.msra.mxu0 0.0
      %359 = vmatprep.subr.mxu0 0.0
      %360 = vmatpush1.msra.mxu0 0.0
      %361 = vmatprep.subr.mxu0 0.0
      %362 = vmatpush1.msra.mxu0 0.0
      %363 = vmatprep.subr.mxu0 0.0
      %364 = vmatpush1.msra.mxu0 %v328
      %365 = vmatprep.subr.mxu0 0.0
      %366 = vmatpush1.msra.mxu0 %v327
      %367 = vmatprep.subr.mxu0 0.0
      %368 = vmatpush1.msra.mxu0 %v326
      %369 = vmatprep.subr.mxu0 0.0
      %370 = vmatpush1.msra.mxu0 %v325
      %371 = vmatprep.subr.mxu0 0.0
      %372 = vmatpush2.msra.mxu0 0.0
      %373 = vmatprep.subr.mxu0 0.0
      %374 = vmatpush2.msra.mxu0 0.0
      %375 = vmatprep.subr.mxu0 0.0
      %376 = vmatpush2.msra.mxu0 0.0
      %377 = vmatprep.subr.mxu0 0.0
      %378 = vmatpush2.msra.mxu0 0.0
      %379 = vmatprep.subr.mxu0 0.0
      %380 = vmatpush2.msra.mxu0 0.0
      %381 = vmatprep.subr.mxu0 0.0
      %382 = vmatpush2.msra.mxu0 0.0
      %383 = vmatprep.subr.mxu0 0.0
      %384 = vmatpush2.msra.mxu0 0.0
      %385 = vmatprep.subr.mxu0 0.0
      %386 = vmatpush2.msra.mxu0 0.0
      %387 = vmatprep.subr.mxu0 0.0
      %388 = vmatpush2.msra.mxu0 0.0
      %389 = vmatprep.subr.mxu0 0.0
      %390 = vmatpush2.msra.mxu0 0.0
      %391 = vmatprep.subr.mxu0 0.0
      %392 = vmatpush2.msra.mxu0 0.0
      %393 = vmatprep.subr.mxu0 0.0
      %394 = vmatpush2.msra.mxu0 0.0
      %395 = vmatprep.subr.mxu0 0.0
      %396 = vmatpush2.msra.mxu0 0.0
      %397 = vmatprep.subr.mxu0 0.0
      %398 = vmatpush2.msra.mxu0 0.0
      %399 = vmatprep.subr.mxu0 0.0
      %400 = vmatpush2.msra.mxu0 0.0
      %401 = vmatprep.subr.mxu0 0.0
      %402 = vmatpush2.msra.mxu0 0.0
      %403 = vmatprep.mubr.f32.mxu0 0.0
      %404 = vmatmul.mubr.f32.gmra.mxu0 %v337
      %v405 = vpop.f32.mrf.mxu0
      %v406 = vadd.f32 %v334, %v405
      %v407 = vpop.f32.mrf.mxu0
      %408 = vdwg.mxu0
      %v409 = vtanh.pop %v406
      %v410 = vmax.f32 %v409, 0.0
      %vm411 = vcmask 25600
      %412 = vst.msk [vmem:[#allocation4] sm:$0x3] %vm411, %v410
    $region37: #{tpu_custom_call.1} parent=1 // pred_fallthru
      _
    // Predicated region
    $region38: #{tpu_custom_call.1} parent=1 // pred_check
      _
    $region39: #{tpu_custom_call.1} parent=1 // pred_check_branch
      %414 = sbr.rel (0) target = $region41
    $region40: #{tpu_custom_call.1} parent=1 // pred_region
      %s416 = ssub.s32 32, 32
      %417 = vsyncadd [#allocation5], %s416
      %s419 = sshll.u32 [#allocation4], 4
      %s420 = int_to_ptr.vmem [resolvable:$true] %s419
      %422 = dma.vmem_to_hbm [thread:$0]  %s420, 32, %s6, [#allocation5]
    $region41: #{tpu_custom_call.1} parent=1 // pred_fallthru
      _
    // Predicated region
    $region42: #{tpu_custom_call.1} parent=1 // pred_check
      _
    $region43: #{tpu_custom_call.1} parent=1 // pred_check_branch
      %424 = sbr.rel (0) target = $region45
    $region44: #{tpu_custom_call.1} parent=1 // pred_region
      %425 = dma.done [#allocation5], 32
    $region45: #{tpu_custom_call.1} parent=1 // pred_fallthru
      _
    %426 = vsyncpa [#allocation5], 1

</llo_original>
